<compile_context>
chip_gen: v6e
topology: v6e:2x2x1
jax: 0.10.0
libtpu: 0.0.40
codegen_flags: <defaults>
</compile_context>

<pallas_src>
import jax
import jax.numpy as jnp
from jax.experimental import pallas as pl
from jax.experimental.pallas import tpu as pltpu


# ----------------------------- Pallas kernel --------------------------------

def ca_layer_kernel(x_ref, w1t_ref, b1_ref, w2t_ref, b2_ref, o_ref):
    """One grid step = Nb batch elements, full channel + spatial extent.

    x_ref  : (Nb, C, HW)  input block (NCHW with spatial flattened -> HW on lanes)
    w1t_ref: (C, Cr)      conv1 1x1 effective (post weight-norm) weight, transposed
    b1_ref : (1, Cr)
    w2t_ref: (Cr, C)      conv2 1x1 effective weight, transposed
    b2_ref : (1, C)
    o_ref  : (Nb, C, HW)
    """
    nb, c, hw = x_ref.shape

    # AdaptiveAvgPool2d(1): chunked sum over the spatial (lane) axis with an f32
    # accumulator.  Chunking (a) avoids materializing a full-block f32 copy when
    # x is bf16 and (b) bounds the live vector footprint of the reduce as the
    # batch-folded blocks grow.
    CHUNK = 512                                                   # 4 lane tiles
    acc = jnp.zeros((nb, c), jnp.float32)
    start = 0
    while start < hw:                                             # static loop
        stop = min(start + CHUNK, hw)
        acc = acc + jnp.sum(x_ref[:, :, start:stop].astype(jnp.float32), axis=-1)
        start = stop
    y = acc * (1.0 / float(hw))                                   # (Nb, C)

    # 1x1 convolutions on a 1x1 spatial map == tiny dense matmuls. Not MXU-bound
    # work, but only a few bundles; hidden under the block DMA of the pipeline.
    h = jnp.dot(y, w1t_ref[...], preferred_element_type=jnp.float32) + b1_ref[...]   # (Nb, Cr)
    z = jnp.dot(h, w2t_ref[...], preferred_element_type=jnp.float32) + b2_ref[...]   # (Nb, C)

    g = jax.nn.sigmoid(z).astype(o_ref.dtype)                     # (Nb, C) channel gate
    # TODO(synk): if C ever reaches >=128, compute the FC chain transposed so the
    # gate lands (C, Nb) sublane-major and avoids the per-block XLU relayout.

    # Gate apply: re-read x_ref here (do NOT hold the block in a Python variable
    # across the FC/sigmoid sequence) so Mosaic streams vld -> vmul -> vst with a
    # lane-dense full-width store instead of pinning/spilling vregs.
    o_ref[...] = x_ref[...] * g[:, :, None]


# ------------------------- block / VMEM sizing helpers -----------------------

def _round_up(v, m):
    return ((v + m - 1) // m) * m


def _padded_f32_tile_bytes(rows, cols):
    """VMEM footprint of an f32 (rows, cols) operand after (8,128) tile padding."""
    return _round_up(max(rows, 1), 8) * _round_up(max(cols, 1), 128) * 4


def _tpu_vmem_capacity_bytes():
    try:
        return int(pltpu.get_tpu_info().vmem_capacity_bytes)
    except Exception:
        # Unknown backend / API: assume the smallest generation (v7x, 64 MiB).
        return 64 << 20


def _step_budget(vmem_cap):
    """(per-step byte target, VMEM headroom) — generation-aware."""
    if vmem_cap <= (64 << 20):          # v7x: 64 MiB VMEM, ~3.2 TB/s HBM
        return 8 << 20, 12 << 20
    return 14 << 20, 16 << 20           # v5e/v6e: 128 MiB VMEM, slower HBM


def _pick_batch_block(n, per_sample_bytes, max_step_bytes):
    """Largest divisor of n whose (nb, C, HW) block fits max_step_bytes, while
    keeping >= min(n, 4) grid steps so a 2-TensorCore chip gets >= 2
    software-pipelined steps per core."""
    max_nb = max(1, max_step_bytes // max(1, per_sample_bytes))
    min_steps = min(n, 4)
    max_nb = min(max_nb, max(1, n // min_steps), n)
    for nb in range(int(max_nb), 0, -1):
        if n % nb == 0:
            return nb
    return 1


# ------------------------------- wrapper --------------------------------------

def ca_layer_pallas(x_nchw, w1t, b1, w2t, b2):
    """x_nchw: (N, C, H, W). Returns (N, C, H, W)."""
    N, C, H, W = x_nchw.shape
    HW = H * W
    Cr = w1t.shape[1]
    dtype_bytes = jnp.dtype(x_nchw.dtype).itemsize

    # Free view of NCHW: no transpose, no extra HBM pass.
    x_flat = x_nchw.reshape(N, C, HW)
    b1_2d = b1.reshape(1, Cr)
    b2_2d = b2.reshape(1, C)

    vmem_cap = _tpu_vmem_capacity_bytes()
    target_step_bytes, headroom = _step_budget(vmem_cap)
    vmem_budget = max(8 << 20, vmem_cap - headroom)

    per_sample = C * HW * dtype_bytes
    # Per-step bytes bounded by the generation target AND by the double-buffered
    # (2 in + 2 out) footprint fitting under the VMEM budget.
    max_step_bytes = max(per_sample, min(target_step_bytes, vmem_budget // 4))
    nb = _pick_batch_block(N, per_sample, max_step_bytes)
    grid = N // nb
    block_bytes = nb * per_sample

    # Weights/biases: (8,128)-tile padded footprint, x2 for pipeline buffering.
    weight_bytes = 2 * (_padded_f32_tile_bytes(C, Cr) + _padded_f32_tile_bytes(1, Cr)
                        + _padded_f32_tile_bytes(Cr, C) + _padded_f32_tile_bytes(1, C))

    # Explicit limit so scoped defaults (16/32 MiB) never bind, capped below the
    # physical capacity with headroom for compiler-internal scratch.
    vmem_limit = int(min(vmem_budget,
                         max(8 << 20, 4 * block_bytes + weight_bytes + (2 << 20))))

    cost = pl.CostEstimate(
        flops=2 * N * C * HW + 4 * N * C * Cr,
        transcendentals=N * C,
        bytes_accessed=2 * N * C * HW * dtype_bytes + weight_bytes,
    )

    out = pl.pallas_call(
        ca_layer_kernel,
        out_shape=jax.ShapeDtypeStruct((N, C, HW), x_nchw.dtype),
        grid_spec=pltpu.PrefetchScalarGridSpec(
            num_scalar_prefetch=0,
            grid=(grid,),
            in_specs=[
                # Last block dims are the FULL (C, HW) extents (lane-dense when
                # HW % 128 == 0; full-extent blocks are always legal otherwise,
                # and the pool mean divides by the true HW since nothing is padded).
                pl.BlockSpec((nb, C, HW), lambda i: (i, 0, 0)),
                pl.BlockSpec((C, Cr), lambda i: (0, 0)),
                pl.BlockSpec((1, Cr), lambda i: (0, 0)),
                pl.BlockSpec((Cr, C), lambda i: (0, 0)),
                pl.BlockSpec((1, C), lambda i: (0, 0)),
            ],
            out_specs=pl.BlockSpec((nb, C, HW), lambda i: (i, 0, 0)),
        ),
        compiler_params=pltpu.CompilerParams(
            dimension_semantics=("parallel",),
            vmem_limit_bytes=vmem_limit,
        ),
        cost_estimate=cost,
    )(x_flat, w1t, b1_2d, w2t, b2_2d)

    return out.reshape(N, C, H, W)


# -------------------------- parameter setup (glue) ---------------------------

def _weight_norm_effective(v, g):
    # torch weight_norm(dim=0): w = g * v / ||v||, norm over all dims except 0.
    norm = jnp.sqrt(jnp.sum(v * v, axis=(1, 2, 3), keepdims=True))
    return g * v / norm


def init_ca_params(key, x_nchw, channel, reduction, eps=1e-8):
    """Deterministic parameter init. Replicates Conv2d.init_parameters
    (data-dependent weight-norm init run on the first forward) in plain JAX."""
    Cr = channel // reduction
    k1, k2 = jax.random.split(key)

    # init_parameters(): weight_v ~ N(0, 0.05), weight_g = 1, bias = 0
    v1 = 0.05 * jax.random.normal(k1, (Cr, channel, 1, 1), jnp.float32)
    g1 = jnp.ones((Cr, 1, 1, 1), jnp.float32)
    b1 = jnp.zeros((Cr,), jnp.float32)
    v2 = 0.05 * jax.random.normal(k2, (channel, Cr, 1, 1), jnp.float32)
    g2 = jnp.ones((channel, 1, 1, 1), jnp.float32)
    b2 = jnp.zeros((channel,), jnp.float32)

    # Input to ca_block on the first call is avg_pool(x): (N, C, 1, 1) -> (N, C)
    y = jnp.mean(x_nchw, axis=(2, 3))                          # (N, C)

    # data-dependent init of conv1 (1x1 conv == matmul; init_scale = 0.01)
    w1 = _weight_norm_effective(v1, g1).reshape(Cr, channel)
    t1 = y @ w1.T                                              # (N, Cr), bias = 0
    m1 = jnp.mean(t1, axis=0)
    s1 = 0.01 / jnp.sqrt(jnp.var(t1, axis=0, ddof=1) + eps)    # torch.var is unbiased
    g1 = g1 * s1.reshape(Cr, 1, 1, 1)
    b1 = b1 - m1 * s1
    out1 = s1[None, :] * (t1 - m1[None, :])                    # conv1 output with new params

    # data-dependent init of conv2 (input = conv1 output; act=Identity, dropout p=0)
    w2 = _weight_norm_effective(v2, g2).reshape(channel, Cr)
    t2 = out1 @ w2.T
    m2 = jnp.mean(t2, axis=0)
    s2 = 0.01 / jnp.sqrt(jnp.var(t2, axis=0, ddof=1) + eps)
    g2 = g2 * s2.reshape(channel, 1, 1, 1)
    b2 = b2 - m2 * s2

    # Effective (post weight-norm) 1x1 weights, transposed for (Nb,C) @ (C,Cr).
    w1_eff = _weight_norm_effective(v1, g1).reshape(Cr, channel)
    w2_eff = _weight_norm_effective(v2, g2).reshape(channel, Cr)
    return w1_eff.T, b1, w2_eff.T, b2


# ----------------------------- pure-JAX reference ----------------------------

def ca_layer_ref(x_nchw, w1t, b1, w2t, b2):
    y = jnp.mean(x_nchw, axis=(2, 3))            # (N, C)
    h = y @ w1t + b1
    z = h @ w2t + b2
    g = jax.nn.sigmoid(z)                        # (N, C)
    return x_nchw * g[:, :, None, None]


# ----------------------------------- main ------------------------------------

if __name__ == "__main__":
    key = jax.random.PRNGKey(0)
    kx, kp = jax.random.split(key)

    # channel=32, reduction=8 -> hidden 4; N=8 gives 4 parallel grid steps
    # (>= 2 per TensorCore on a 2-core chip) with nb=2 batch folded per step.
    N, C, H, W = 8, 32, 16, 16
    reduction = 8

    x = jax.random.normal(kx, (N, C, H, W), dtype=jnp.float32)
    w1t, b1, w2t, b2 = init_ca_params(kp, x, C, reduction)

    out = ca_layer_pallas(x, w1t, b1, w2t, b2)
    out = jax.block_until_ready(out)

    ref = ca_layer_ref(x, w1t, b1, w2t, b2)
    assert out.shape == x.shape and out.dtype == x.dtype
    assert jnp.allclose(out, ref, atol=1e-5, rtol=1e-5), "Pallas output mismatch vs reference"

    print("KERNEL_OK")
</pallas_src>

<mosaic_0001>
module attributes {stable_mosaic.version = 11 : i64} {
  func.func @ca_layer_kernel(%arg0: i32, %arg1: memref<2x32x256xf32, #tpu.memory_space<vmem>>, %arg2: memref<32x4xf32, #tpu.memory_space<vmem>>, %arg3: memref<1x4xf32, #tpu.memory_space<vmem>>, %arg4: memref<4x32xf32, #tpu.memory_space<vmem>>, %arg5: memref<1x32xf32, #tpu.memory_space<vmem>>, %arg6: memref<2x32x256xf32, #tpu.memory_space<vmem>>) attributes {dimension_semantics = [#tpu.dimension_semantics<parallel>], iteration_bounds = array<i64: 4>, scalar_prefetch = 0 : i64, scratch_operands = 0 : i64, tpu.core_type = #tpu.core_type<tc>, window_params = [{transform_indices = @transform_0, window_bounds = array<i64: 2, 32, 256>}, {pipeline_mode = #tpu.pipeline_mode<synchronous>, transform_indices = @transform_1, window_bounds = array<i64: 32, 4>}, {pipeline_mode = #tpu.pipeline_mode<synchronous>, transform_indices = @transform_2, window_bounds = array<i64: 1, 4>}, {pipeline_mode = #tpu.pipeline_mode<synchronous>, transform_indices = @transform_3, window_bounds = array<i64: 4, 32>}, {pipeline_mode = #tpu.pipeline_mode<synchronous>, transform_indices = @transform_4, window_bounds = array<i64: 1, 32>}, {transform_indices = @transform_5, window_bounds = array<i64: 2, 32, 256>}]} {
    %cst = arith.constant 0.000000e+00 : f32
    %0 = vector.broadcast %cst : f32 to vector<2x32xf32>
    %c0 = arith.constant 0 : index
    %c0_0 = arith.constant 0 : index
    %c0_1 = arith.constant 0 : index
    %1 = vector.load %arg1[%c0, %c0_0, %c0_1] : memref<2x32x256xf32, #tpu.memory_space<vmem>>, vector<2x32x256xf32>
    %cst_2 = arith.constant dense<0.000000e+00> : vector<2x32xf32>
    %2 = vector.multi_reduction <add>, %1, %cst_2 [2] : vector<2x32x256xf32> to vector<2x32xf32>
    %3 = arith.addf %0, %2 : vector<2x32xf32>
    %cst_3 = arith.constant 3.906250e-03 : f32
    %4 = vector.broadcast %cst_3 : f32 to vector<2x32xf32>
    %5 = arith.mulf %3, %4 : vector<2x32xf32>
    %c0_4 = arith.constant 0 : index
    %c0_5 = arith.constant 0 : index
    %6 = vector.load %arg2[%c0_4, %c0_5] : memref<32x4xf32, #tpu.memory_space<vmem>>, vector<32x4xf32>
    %cst_6 = arith.constant dense<0.000000e+00> : vector<2x4xf32>
    %7 = tpu.matmul %5, %6, %cst_6 {dimension_numbers = #tpu.dot_dimension_numbers<[1], [0], [0], [1], [0, 0, 1, 1], [], []>} : vector<2x32xf32>, vector<32x4xf32>, vector<2x4xf32> -> vector<2x4xf32>
    %c0_7 = arith.constant 0 : index
    %c0_8 = arith.constant 0 : index
    %8 = vector.load %arg3[%c0_7, %c0_8] : memref<1x4xf32, #tpu.memory_space<vmem>>, vector<1x4xf32>
    %9 = vector.broadcast %8 : vector<1x4xf32> to vector<2x4xf32>
    %10 = arith.addf %7, %9 : vector<2x4xf32>
    %c0_9 = arith.constant 0 : index
    %c0_10 = arith.constant 0 : index
    %11 = vector.load %arg4[%c0_9, %c0_10] : memref<4x32xf32, #tpu.memory_space<vmem>>, vector<4x32xf32>
    %cst_11 = arith.constant dense<0.000000e+00> : vector<2x32xf32>
    %12 = tpu.matmul %10, %11, %cst_11 {dimension_numbers = #tpu.dot_dimension_numbers<[1], [0], [0], [1], [0, 0, 1, 1], [], []>} : vector<2x4xf32>, vector<4x32xf32>, vector<2x32xf32> -> vector<2x32xf32>
    %c0_12 = arith.constant 0 : index
    %c0_13 = arith.constant 0 : index
    %13 = vector.load %arg5[%c0_12, %c0_13] : memref<1x32xf32, #tpu.memory_space<vmem>>, vector<1x32xf32>
    %14 = vector.broadcast %13 : vector<1x32xf32> to vector<2x32xf32>
    %15 = arith.addf %12, %14 : vector<2x32xf32>
    %16 = arith.negf %15 : vector<2x32xf32>
    %17 = math.exp %16 : vector<2x32xf32>
    %cst_14 = arith.constant 1.000000e+00 : f32
    %18 = vector.broadcast %cst_14 : f32 to vector<2x32xf32>
    %19 = arith.addf %18, %17 : vector<2x32xf32>
    %20 = arith.divf %18, %19 : vector<2x32xf32>
    %c0_15 = arith.constant 0 : index
    %c0_16 = arith.constant 0 : index
    %c0_17 = arith.constant 0 : index
    %21 = vector.load %arg1[%c0_15, %c0_16, %c0_17] : memref<2x32x256xf32, #tpu.memory_space<vmem>>, vector<2x32x256xf32>
    %22 = vector.shape_cast %20 : vector<2x32xf32> to vector<2x32x1xf32>
    %23 = vector.broadcast %22 : vector<2x32x1xf32> to vector<2x32x256xf32>
    %24 = arith.mulf %21, %23 : vector<2x32x256xf32>
    %c0_18 = arith.constant 0 : index
    %c0_19 = arith.constant 0 : index
    %c0_20 = arith.constant 0 : index
    %25 = vector.load %arg6[%c0_18, %c0_19, %c0_20] : memref<2x32x256xf32, #tpu.memory_space<vmem>>, vector<2x32x256xf32>
    tpu.vector_store %arg6[%c0_18, %c0_19, %c0_20], %24 {strides = array<i32>} : memref<2x32x256xf32, #tpu.memory_space<vmem>>, vector<2x32x256xf32>,
    return
  }
  func.func @transform_0(%arg0: i32) -> (i32, i32, i32) {
    %c0_i32 = arith.constant 0 : i32
    %c0_i32_0 = arith.constant 0 : i32
    %c0_i32_1 = arith.constant 0 : i32
    return %arg0, %c0_i32, %c0_i32_0 : i32, i32, i32
  }
  func.func @transform_1(%arg0: i32) -> (i32, i32) {
    %c0_i32 = arith.constant 0 : i32
    %c0_i32_0 = arith.constant 0 : i32
    %c0_i32_1 = arith.constant 0 : i32
    return %c0_i32, %c0_i32_0 : i32, i32
  }
  func.func @transform_2(%arg0: i32) -> (i32, i32) {
    %c0_i32 = arith.constant 0 : i32
    %c0_i32_0 = arith.constant 0 : i32
    %c0_i32_1 = arith.constant 0 : i32
    return %c0_i32, %c0_i32_0 : i32, i32
  }
  func.func @transform_3(%arg0: i32) -> (i32, i32) {
    %c0_i32 = arith.constant 0 : i32
    %c0_i32_0 = arith.constant 0 : i32
    %c0_i32_1 = arith.constant 0 : i32
    return %c0_i32, %c0_i32_0 : i32, i32
  }
  func.func @transform_4(%arg0: i32) -> (i32, i32) {
    %c0_i32 = arith.constant 0 : i32
    %c0_i32_0 = arith.constant 0 : i32
    %c0_i32_1 = arith.constant 0 : i32
    return %c0_i32, %c0_i32_0 : i32, i32
  }
  func.func @transform_5(%arg0: i32) -> (i32, i32, i32) {
    %c0_i32 = arith.constant 0 : i32
    %c0_i32_0 = arith.constant 0 : i32
    %c0_i32_1 = arith.constant 0 : i32
    return %arg0, %c0_i32, %c0_i32_0 : i32, i32, i32
  }
}

</mosaic_0001>

<llo_original>
// kernel: tpu_custom_call.1
$region0: #{tpu_custom_call.1}
  #allocation0 [shape = 'u32[]', space=smem, size = 0x4, offset = 0x4, fixed_abs, tag = 'smem constant byte address 0x4 - core index']
  #allocation1 [shape = 'u32[144,128]{1,0:T(1,128)}', space=vmem, size = 0x12000, scoped, tag = 'internal scratch']
  %s0 = inlined_call_operand.hbm [shape: f32[8,32,256], index: 0, kind: input, shape index: {}]
  %s1 = inlined_call_operand.vmem [shape: f32[32,4], index: 1, kind: input, shape index: {}]
  %s2 = inlined_call_operand.vmem [shape: f32[1,4], index: 2, kind: input, shape index: {}]
  %s3 = inlined_call_operand.vmem [shape: f32[4,32], index: 3, kind: input, shape index: {}]
  %s4 = inlined_call_operand.vmem [shape: f32[1,32], index: 4, kind: input, shape index: {}]
  %s5 = inlined_call_operand.hbm [shape: f32[8,32,256], index: 5, kind: output, shape index: {}]
  %s6 = sld [smem:[#allocation0]]
  $region57: #{tpu_custom_call.1} parent=0
    _
  %s8 = ssub.s32 1, %s6
  %s9 = scalar_select 0, %s8, %s6
  $region1: #{tpu_custom_call.1} parent=0
    #allocation2 [shape = 'u8[131072]{0}', space=vmem, size = 0x20000, scoped, tag = 'input window, operand 0']
    #allocation3 [shape = 's32[2]{0}', space=sflag, size = 0x8, scoped, tag = 'scoped memory for tpu_custom_call.1']
    #allocation4 [shape = 's32[2]{0}', space=sflag, size = 0x8, scoped, tag = 'scoped memory for tpu_custom_call.1']
    #allocation5 [shape = 'u8[131072]{0}', space=vmem, size = 0x20000, scoped, tag = 'output window, operand 0']
    %10 = vsyncpa [#allocation3], 0
    %s11 = scalar_lea.sflag [#allocation3], 1
    %12 = vsyncpa %s11, 0
    %13 = vsyncpa [#allocation4], 0
    %s14 = scalar_lea.sflag [#allocation4], 1
    %15 = vsyncpa %s14, 0
    loop: start=0, step=1, limit=6
    $region2: #{tpu_custom_call.1} parent=1 // loop_pre_header
      _
    $region3: #{tpu_custom_call.1} parent=1 // loop_header
      %s17 = sphi 0, %s21
      %p18 = scmp.ge.s32.totalorder %s17, 6
      %s27 = sphi 0, %s29
      %s30 = sphi 0, %s27
      %s31 = sphi 0, %s30
      %s47 = sphi 0, %s31
      %s51 = sphi 0, %s51
      %s53 = sphi 0, %s51
      %s54 = sphi 0, %s53
      %s68 = sphi 0, %s54
      %s72 = sphi 0, %s72
      %s74 = sphi 0, %s72
      %s75 = sphi 0, %s74
      %s89 = sphi 0, %s75
      %s93 = sphi 0, %s93
      %s95 = sphi 0, %s93
      %s96 = sphi 0, %s95
      %s110 = sphi 0, %s96
      %s114 = sphi 0, %s114
      %s116 = sphi 0, %s114
      %s117 = sphi 0, %s116
      %s131 = sphi 0, %s117
      %s137 = sphi 0, %s139
      %s140 = sphi 0, %s137
      %s141 = sphi 0, %s140
      %s157 = sphi 0, %s141
    $region4: #{tpu_custom_call.1} parent=1 // loop_header_branch
      %20 = sbr.rel (%p18) target = $region8
    $region5: #{tpu_custom_call.1} parent=1 // loop_body
      %s22 = ssub.s32 %s17, 1
      %s23 = ssub.s32 %s17, 2
      %s24 = sadd.s32 %s17, 1
      %s25 = ssub.s32 %s17, %s24
      %p26 = scmp.eq.s32.totalorder %s25, 0
      %s28 = sadd.s32 %s27, 1
      %s29 = scalar_select %p26, %s27, %s28
      %p32 = pneg %p26
      %p33 = scmp.eq.s32.totalorder %s17, 3
      %p34 = por %p32, %p33
      %p35 = scmp.ne.s32.totalorder %s27, %s30
      %p36 = scmp.eq.s32.totalorder %s17, 0
      %p37 = por %p35, %p36
      %p38 = scmp.ne.s32.totalorder %s27, %s30
      %p39 = scmp.eq.s32.totalorder %s22, 3
      %p40 = por %p38, %p39
      %p41 = scmp.ne.s32.totalorder %s30, %s31
      %p42 = scmp.eq.s32.totalorder %s22, 0
      %p43 = por %p41, %p42
      %p44 = scmp.ne.s32.totalorder %s30, %s31
      %p45 = scmp.eq.s32.totalorder %s23, 3
      %p46 = por %p44, %p45
      %p48 = scmp.ne.s32.totalorder %s31, %s47
      %p49 = scmp.eq.s32.totalorder %s23, 0
      %p50 = por %p48, %p49
      %s52 = sadd.s32 %s51, 1
      %p55 = scmp.eq.s32.totalorder %s17, 3
      %p56 = scmp.ne.s32.totalorder %s51, %s53
      %p57 = scmp.eq.s32.totalorder %s17, 0
      %p58 = por %p56, %p57
      %p59 = scmp.ne.s32.totalorder %s51, %s53
      %p60 = scmp.eq.s32.totalorder %s22, 3
      %p61 = por %p59, %p60
      %p62 = scmp.ne.s32.totalorder %s53, %s54
      %p63 = scmp.eq.s32.totalorder %s22, 0
      %p64 = por %p62, %p63
      %p65 = scmp.ne.s32.totalorder %s53, %s54
      %p66 = scmp.eq.s32.totalorder %s23, 3
      %p67 = por %p65, %p66
      %p69 = scmp.ne.s32.totalorder %s54, %s68
      %p70 = scmp.eq.s32.totalorder %s23, 0
      %p71 = por %p69, %p70
      %s73 = sadd.s32 %s72, 1
      %p76 = scmp.eq.s32.totalorder %s17, 3
      %p77 = scmp.ne.s32.totalorder %s72, %s74
      %p78 = scmp.eq.s32.totalorder %s17, 0
      %p79 = por %p77, %p78
      %p80 = scmp.ne.s32.totalorder %s72, %s74
      %p81 = scmp.eq.s32.totalorder %s22, 3
      %p82 = por %p80, %p81
      %p83 = scmp.ne.s32.totalorder %s74, %s75
      %p84 = scmp.eq.s32.totalorder %s22, 0
      %p85 = por %p83, %p84
      %p86 = scmp.ne.s32.totalorder %s74, %s75
      %p87 = scmp.eq.s32.totalorder %s23, 3
      %p88 = por %p86, %p87
      %p90 = scmp.ne.s32.totalorder %s75, %s89
      %p91 = scmp.eq.s32.totalorder %s23, 0
      %p92 = por %p90, %p91
      %s94 = sadd.s32 %s93, 1
      %p97 = scmp.eq.s32.totalorder %s17, 3
      %p98 = scmp.ne.s32.totalorder %s93, %s95
      %p99 = scmp.eq.s32.totalorder %s17, 0
      %p100 = por %p98, %p99
      %p101 = scmp.ne.s32.totalorder %s93, %s95
      %p102 = scmp.eq.s32.totalorder %s22, 3
      %p103 = por %p101, %p102
      %p104 = scmp.ne.s32.totalorder %s95, %s96
      %p105 = scmp.eq.s32.totalorder %s22, 0
      %p106 = por %p104, %p105
      %p107 = scmp.ne.s32.totalorder %s95, %s96
      %p108 = scmp.eq.s32.totalorder %s23, 3
      %p109 = por %p107, %p108
      %p111 = scmp.ne.s32.totalorder %s96, %s110
      %p112 = scmp.eq.s32.totalorder %s23, 0
      %p113 = por %p111, %p112
      %s115 = sadd.s32 %s114, 1
      %p118 = scmp.eq.s32.totalorder %s17, 3
      %p119 = scmp.ne.s32.totalorder %s114, %s116
      %p120 = scmp.eq.s32.totalorder %s17, 0
      %p121 = por %p119, %p120
      %p122 = scmp.ne.s32.totalorder %s114, %s116
      %p123 = scmp.eq.s32.totalorder %s22, 3
      %p124 = por %p122, %p123
      %p125 = scmp.ne.s32.totalorder %s116, %s117
      %p126 = scmp.eq.s32.totalorder %s22, 0
      %p127 = por %p125, %p126
      %p128 = scmp.ne.s32.totalorder %s116, %s117
      %p129 = scmp.eq.s32.totalorder %s23, 3
      %p130 = por %p128, %p129
      %p132 = scmp.ne.s32.totalorder %s117, %s131
      %p133 = scmp.eq.s32.totalorder %s23, 0
      %p134 = por %p132, %p133
      %s135 = ssub.s32 %s17, %s24
      %p136 = scmp.eq.s32.totalorder %s135, 0
      %s138 = sadd.s32 %s137, 1
      %s139 = scalar_select %p136, %s137, %s138
      %p142 = pneg %p136
      %p143 = scmp.eq.s32.totalorder %s17, 3
      %p144 = por %p142, %p143
      %p145 = scmp.ne.s32.totalorder %s137, %s140
      %p146 = scmp.eq.s32.totalorder %s17, 0
      %p147 = por %p145, %p146
      %p148 = scmp.ne.s32.totalorder %s137, %s140
      %p149 = scmp.eq.s32.totalorder %s22, 3
      %p150 = por %p148, %p149
      %p151 = scmp.ne.s32.totalorder %s140, %s141
      %p152 = scmp.eq.s32.totalorder %s22, 0
      %p153 = por %p151, %p152
      %p154 = scmp.ne.s32.totalorder %s140, %s141
      %p155 = scmp.eq.s32.totalorder %s23, 3
      %p156 = por %p154, %p155
      %p158 = scmp.ne.s32.totalorder %s141, %s157
      %p159 = scmp.eq.s32.totalorder %s23, 0
      %p160 = por %p158, %p159
      %p161 = scmp.le.s32.totalorder 1, %s17
      %p162 = scmp.lt.s32.totalorder %s17, 5
      %p163 = pnand %p161, %p162
      %p164 = pneg %p163
      // Predicated region
      $region9: #{tpu_custom_call.1} parent=5 // pred_check
        _
      $region10: #{tpu_custom_call.1} parent=5 // pred_check_branch
        %166 = sbr.rel (%p163) target = $region12
      $region11: #{tpu_custom_call.1} parent=5 // pred_region
        %s167 = ssub.s32 %s17, 1
        // Predicated region
        $region13: #{tpu_custom_call.1} parent=11 // pred_check
          %p168 = pneg %p64
        $region14: #{tpu_custom_call.1} parent=11 // pred_check_branch
          %170 = sbr.rel (%p168) target = $region16
        $region15: #{tpu_custom_call.1} parent=11 // pred_region
          _
        $region16: #{tpu_custom_call.1} parent=11 // pred_fallthru
          _
        // Predicated region
        $region17: #{tpu_custom_call.1} parent=11 // pred_check
          %p171 = pneg %p85
        $region18: #{tpu_custom_call.1} parent=11 // pred_check_branch
          %173 = sbr.rel (%p171) target = $region20
        $region19: #{tpu_custom_call.1} parent=11 // pred_region
          _
        $region20: #{tpu_custom_call.1} parent=11 // pred_fallthru
          _
        // Predicated region
        $region21: #{tpu_custom_call.1} parent=11 // pred_check
          %p174 = pneg %p106
        $region22: #{tpu_custom_call.1} parent=11 // pred_check_branch
          %176 = sbr.rel (%p174) target = $region24
        $region23: #{tpu_custom_call.1} parent=11 // pred_region
          _
        $region24: #{tpu_custom_call.1} parent=11 // pred_fallthru
          _
        // Predicated region
        $region25: #{tpu_custom_call.1} parent=11 // pred_check
          %p177 = pneg %p127
        $region26: #{tpu_custom_call.1} parent=11 // pred_check_branch
          %179 = sbr.rel (%p177) target = $region28
        $region27: #{tpu_custom_call.1} parent=11 // pred_region
          _
        $region28: #{tpu_custom_call.1} parent=11 // pred_fallthru
          _
      $region12: #{tpu_custom_call.1} parent=5 // pred_fallthru
        _
      %p180 = scmp.lt.s32.totalorder %s17, 4
      // Predicated region
      $region29: #{tpu_custom_call.1} parent=5 // pred_check
        %p181 = pneg %p180
      $region30: #{tpu_custom_call.1} parent=5 // pred_check_branch
        %183 = sbr.rel (%p181) target = $region32
      $region31: #{tpu_custom_call.1} parent=5 // pred_region
        // Predicated region
        $region33: #{tpu_custom_call.1} parent=31 // pred_check
          %p184 = pneg %p37
        $region34: #{tpu_custom_call.1} parent=31 // pred_check_branch
          %186 = sbr.rel (%p184) target = $region36
        $region35: #{tpu_custom_call.1} parent=31 // pred_region
          %s187 = sand.u32 %s27, 1
          %s188 = scalar_lea.sflag [#allocation3], %s187
          %s189 = sand.u32 %s27, 1
          %s190 = smul.addr %s189, 128
          %s191 = scalar_lea.vmem [#allocation2], %s190
          %s192 = smul.u32 2, %s17
          %s194 = ssub.s32 2048, 2048
          %195 = vsyncadd %s188, %s194
          %s196 = smul.addr %s192, 8
          %s197 = smul.addr %s196, 128
          %s198 = scalar_lea.hbm %s0, %s197
          %s199 = sshll.u32 %s191, 4
          %s200 = int_to_ptr.vmem [resolvable:$true] %s199
          %205 = dma.hbm_to_vmem [thread:$0]  %s198, 2048, %s200, %s188, 256, 256, 16
        $region36: #{tpu_custom_call.1} parent=31 // pred_fallthru
          _
      $region32: #{tpu_custom_call.1} parent=5 // pred_fallthru
        _
      %p206 = scmp.le.s32.totalorder 1, %s17
      %p207 = scmp.lt.s32.totalorder %s17, 5
      %p208 = pnand %p206, %p207
      %p209 = pneg %p208
      // Predicated region
      $region37: #{tpu_custom_call.1} parent=5 // pred_check
        _
      $region38: #{tpu_custom_call.1} parent=5 // pred_check_branch
        %211 = sbr.rel (%p208) target = $region40
      $region39: #{tpu_custom_call.1} parent=5 // pred_region
        %s212 = ssub.s32 %s17, 1
        %s213 = sand.u32 %s30, 1
        %s214 = scalar_lea.sflag [#allocation3], %s213
        %s215 = sand.u32 %s30, 1
        %s216 = smul.addr %s215, 128
        %s217 = scalar_lea.vmem [#allocation2], %s216
        // Predicated region
        $region41: #{tpu_custom_call.1} parent=39 // pred_check
          %p218 = pneg %p43
        $region42: #{tpu_custom_call.1} parent=39 // pred_check_branch
          %220 = sbr.rel (%p218) target = $region44
        $region43: #{tpu_custom_call.1} parent=39 // pred_region
          %221 = dma.done %s214, 2048
        $region44: #{tpu_custom_call.1} parent=39 // pred_fallthru
          _
        %s222 = sand.u32 %s30, 1
        %s223 = scalar_lea.sflag [#allocation3], %s222
        %s224 = sand.u32 %s30, 1
        %s225 = smul.addr %s224, 128
        %s226 = scalar_lea.vmem [#allocation2], %s225
        %p227 = pneg %p43
        %p228 = pneg %p40
        %p229 = pneg %p64
        %p230 = pneg %p61
        %p231 = pneg %p85
        %p232 = pneg %p82
        %p233 = pneg %p106
        %p234 = pneg %p103
        %p235 = pneg %p127
        %p236 = pneg %p124
        %p237 = pneg %p153
        %p238 = pneg %p150
        %s239 = sand.u32 %s140, 1
        %s240 = scalar_lea.sflag [#allocation4], %s239
        %s241 = sand.u32 %s140, 1
        %s242 = smul.addr %s241, 128
        %s243 = scalar_lea.vmem [#allocation5], %s242
        %s244 = smul.u32 2, %s22
        %s245 = smul.u32 2, %s22
        %v246 = vld [vmem:[%s217] sm:$0xff]
        %v247 = vld [vmem:[%s217 + $0x8] sm:$0xff]
        %v248 = vld [vmem:[%s217 + $0x10] sm:$0xff]
        %v249 = vld [vmem:[%s217 + $0x18] sm:$0xff]
        %v250 = vld [vmem:[%s217 + $0x20] sm:$0xff]
        %v251 = vld [vmem:[%s217 + $0x28] sm:$0xff]
        %v252 = vld [vmem:[%s217 + $0x30] sm:$0xff]
        %v253 = vld [vmem:[%s217 + $0x38] sm:$0xff]
        %v254 = vld [vmem:[%s217 + $0x40] sm:$0xff]
        %v255 = vld [vmem:[%s217 + $0x48] sm:$0xff]
        %v256 = vld [vmem:[%s217 + $0x50] sm:$0xff]
        %v257 = vld [vmem:[%s217 + $0x58] sm:$0xff]
        %v258 = vld [vmem:[%s217 + $0x60] sm:$0xff]
        %v259 = vld [vmem:[%s217 + $0x68] sm:$0xff]
        %v260 = vld [vmem:[%s217 + $0x70] sm:$0xff]
        %v261 = vld [vmem:[%s217 + $0x78] sm:$0xff]
        %v262 = vadd.f32 %v246, %v247
        %263 = vadd.xlane.f32.xlu0 %v262
        %v264 = vpop.xlane.xlu0 %263
        %v265 = vadd.f32 %v248, %v249
        %266 = vadd.xlane.f32.xlu0 %v265
        %v267 = vpop.xlane.xlu0 %266
        %v268 = vadd.f32 %v250, %v251
        %269 = vadd.xlane.f32.xlu0 %v268
        %v270 = vpop.xlane.xlu0 %269
        %v271 = vadd.f32 %v252, %v253
        %272 = vadd.xlane.f32.xlu0 %v271
        %v273 = vpop.xlane.xlu0 %272
        %v274 = vadd.f32 %v254, %v255
        %275 = vadd.xlane.f32.xlu0 %v274
        %v276 = vpop.xlane.xlu0 %275
        %v277 = vadd.f32 %v256, %v257
        %278 = vadd.xlane.f32.xlu0 %v277
        %v279 = vpop.xlane.xlu0 %278
        %v280 = vadd.f32 %v258, %v259
        %281 = vadd.xlane.f32.xlu0 %v280
        %v282 = vpop.xlane.xlu0 %281
        %v283 = vadd.f32 %v260, %v261
        %284 = vadd.xlane.f32.xlu0 %v283
        %v285 = vpop.xlane.xlu0 %284
        %v286 = vadd.f32 %v264, 0.0
        %v287 = vadd.f32 %v267, 0.0
        %v288 = vadd.f32 %v270, 0.0
        %v289 = vadd.f32 %v273, 0.0
        %v290 = vadd.f32 %v276, 0.0
        %v291 = vadd.f32 %v279, 0.0
        %v292 = vadd.f32 %v282, 0.0
        %v293 = vadd.f32 %v285, 0.0
        %v294 = vmul.f32 %v286, 0.00390625
        %v295 = vmul.f32 %v287, 0.00390625
        %v296 = vmul.f32 %v288, 0.00390625
        %v297 = vmul.f32 %v289, 0.00390625
        %v298 = vmul.f32 %v290, 0.00390625
        %v299 = vmul.f32 %v291, 0.00390625
        %v300 = vmul.f32 %v292, 0.00390625
        %v301 = vmul.f32 %v293, 0.00390625
        %v302 = vld [vmem:[%s1] sm:$0xff]
        %v303 = vld [vmem:[%s1 + $0x8] sm:$0xff]
        %v304 = vld [vmem:[%s1 + $0x10] sm:$0xff]
        %v305 = vld [vmem:[%s1 + $0x18] sm:$0xff]
        %v306 = vld [vmem:[%s2] sm:$0x1]
        %v308 = vlaneseq
        %v309 = vshrl.u32 %v308, 7
        %v310 = vsub.s32 0, %v309
        %v311 = vrot.slane %v306, %v310
        %v321 = vlaneseq
        %v322 = vand.u32 %v321, 127
        %v323 = vlaneseq
        %v324 = vshrl.u32 %v323, 7
        %v325 = vsub.s32 %v322, %v324
        %v326 = vrot.slane %v294, %v325
        %v327 = vadd.s32 %v322, 4294967288
        %v328 = vlaneseq
        %v329 = vshrl.u32 %v328, 7
        %v330 = vsub.s32 %v327, %v329
        %v331 = vrot.slane %v295, %v330
        %vm332 = vcmask 130112
        %v333 = vsel %vm332, %v331, %v326
        %v334 = vadd.s32 %v322, 4294967280
        %v335 = vlaneseq
        %v336 = vshrl.u32 %v335, 7
        %v337 = vsub.s32 %v334, %v336
        %v338 = vrot.slane %v296, %v337
        %vm339 = vcmask 195712
        %v340 = vsel %vm339, %v338, %v333
        %v341 = vadd.s32 %v322, 4294967272
        %v342 = vlaneseq
        %v343 = vshrl.u32 %v342, 7
        %v344 = vsub.s32 %v341, %v343
        %v345 = vrot.slane %v297, %v344
        %vm346 = vcmask 261312
        %v347 = vsel %vm346, %v345, %v340
        %v348 = vlaneseq
        %v349 = vshrl.u32 %v348, 7
        %v350 = vsub.s32 %v322, %v349
        %v351 = vrot.slane %v298, %v350
        %v352 = vlaneseq
        %v353 = vshrl.u32 %v352, 7
        %v354 = vsub.s32 %v327, %v353
        %v355 = vrot.slane %v299, %v354
        %v356 = vsel %vm332, %v355, %v351
        %v357 = vlaneseq
        %v358 = vshrl.u32 %v357, 7
        %v359 = vsub.s32 %v334, %v358
        %v360 = vrot.slane %v300, %v359
        %v361 = vsel %vm339, %v360, %v356
        %v362 = vlaneseq
        %v363 = vshrl.u32 %v362, 7
        %v364 = vsub.s32 %v341, %v363
        %v365 = vrot.slane %v301, %v364
        %v366 = vsel %vm346, %v365, %v361
        %vm367 = vcmask 1041409
        %v368 = vsel %vm367, %v366, %v347
        %vm369 = vcmask 261120
        %v370 = vsel %vm369, %v368, 0
        %372 = vmatprep.subr.mxu0 0.0
        %373 = vmatpush1.msra.mxu0 0.0
        %374 = vmatprep.subr.mxu0 0.0
        %375 = vmatpush1.msra.mxu0 0.0
        %376 = vmatprep.subr.mxu0 0.0
        %377 = vmatpush1.msra.mxu0 0.0
        %378 = vmatprep.subr.mxu0 0.0
        %379 = vmatpush1.msra.mxu0 0.0
        %380 = vmatprep.subr.mxu0 0.0
        %381 = vmatpush1.msra.mxu0 0.0
        %382 = vmatprep.subr.mxu0 0.0
        %383 = vmatpush1.msra.mxu0 0.0
        %384 = vmatprep.subr.mxu0 0.0
        %385 = vmatpush1.msra.mxu0 0.0
        %386 = vmatprep.subr.mxu0 0.0
        %387 = vmatpush1.msra.mxu0 0.0
        %388 = vmatprep.subr.mxu0 0.0
        %389 = vmatpush1.msra.mxu0 0.0
        %390 = vmatprep.subr.mxu0 0.0
        %391 = vmatpush1.msra.mxu0 0.0
        %392 = vmatprep.subr.mxu0 0.0
        %393 = vmatpush1.msra.mxu0 0.0
        %394 = vmatprep.subr.mxu0 0.0
        %395 = vmatpush1.msra.mxu0 0.0
        %396 = vmatprep.subr.mxu0 0.0
        %397 = vmatpush1.msra.mxu0 %v305
        %398 = vmatprep.subr.mxu0 0.0
        %399 = vmatpush1.msra.mxu0 %v304
        %400 = vmatprep.subr.mxu0 0.0
        %401 = vmatpush1.msra.mxu0 %v303
        %402 = vmatprep.subr.mxu0 0.0
        %403 = vmatpush1.msra.mxu0 %v302
        %404 = vmatprep.subr.mxu0 0.0
        %405 = vmatpush2.msra.mxu0 0.0
        %406 = vmatprep.subr.mxu0 0.0
        %407 = vmatpush2.msra.mxu0 0.0
        %408 = vmatprep.subr.mxu0 0.0
        %409 = vmatpush2.msra.mxu0 0.0
        %410 = vmatprep.subr.mxu0 0.0
        %411 = vmatpush2.msra.mxu0 0.0
        %412 = vmatprep.subr.mxu0 0.0
        %413 = vmatpush2.msra.mxu0 0.0
        %414 = vmatprep.subr.mxu0 0.0
        %415 = vmatpush2.msra.mxu0 0.0
        %416 = vmatprep.subr.mxu0 0.0
        %417 = vmatpush2.msra.mxu0 0.0
        %418 = vmatprep.subr.mxu0 0.0
        %419 = vmatpush2.msra.mxu0 0.0
        %420 = vmatprep.subr.mxu0 0.0
        %421 = vmatpush2.msra.mxu0 0.0
        %422 = vmatprep.subr.mxu0 0.0
        %423 = vmatpush2.msra.mxu0 0.0
        %424 = vmatprep.subr.mxu0 0.0
        %425 = vmatpush2.msra.mxu0 0.0
        %426 = vmatprep.subr.mxu0 0.0
        %427 = vmatpush2.msra.mxu0 0.0
        %428 = vmatprep.subr.mxu0 0.0
        %429 = vmatpush2.msra.mxu0 0.0
        %430 = vmatprep.subr.mxu0 0.0
        %431 = vmatpush2.msra.mxu0 0.0
        %432 = vmatprep.subr.mxu0 0.0
        %433 = vmatpush2.msra.mxu0 0.0
        %434 = vmatprep.subr.mxu0 0.0
        %435 = vmatpush2.msra.mxu0 0.0
        %436 = vmatprep.mubr.f32.mxu0 0.0
        %437 = vmatmul.mubr.f32.gmra.mxu0 %v370
        %v438 = vpop.f32.mrf.mxu0
        %v439 = vadd.f32 %v311, %v438
        %v440 = vpop.f32.mrf.mxu0
        %441 = vdwg.mxu0
        %v442 = vld [vmem:[%s3] sm:$0xf]
        %v443 = vld [vmem:[%s4] sm:$0x1]
        %v445 = vlaneseq
        %v446 = vshrl.u32 %v445, 7
        %v447 = vsub.s32 0, %v446
        %v448 = vrot.slane %v443, %v447
        %vm450 = vcmask 31744
        %v452 = vsel %vm450, %v439, 0
        %vm454 = vcmask 1043456
        %v456 = vsel %vm454, %v442, 0
        %458 = vmatprep.subr.mxu0 0.0
        %459 = vmatpush1.msra.mxu0 0.0
        %460 = vmatprep.subr.mxu0 0.0
        %461 = vmatpush1.msra.mxu0 0.0
        %462 = vmatprep.subr.mxu0 0.0
        %463 = vmatpush1.msra.mxu0 0.0
        %464 = vmatprep.subr.mxu0 0.0
        %465 = vmatpush1.msra.mxu0 0.0
        %466 = vmatprep.subr.mxu0 0.0
        %467 = vmatpush1.msra.mxu0 0.0
        %468 = vmatprep.subr.mxu0 0.0
        %469 = vmatpush1.msra.mxu0 0.0
        %470 = vmatprep.subr.mxu0 0.0
        %471 = vmatpush1.msra.mxu0 0.0
        %472 = vmatprep.subr.mxu0 0.0
        %473 = vmatpush1.msra.mxu0 0.0
        %474 = vmatprep.subr.mxu0 0.0
        %475 = vmatpush1.msra.mxu0 0.0
        %476 = vmatprep.subr.mxu0 0.0
        %477 = vmatpush1.msra.mxu0 0.0
        %478 = vmatprep.subr.mxu0 0.0
        %479 = vmatpush1.msra.mxu0 0.0
        %480 = vmatprep.subr.mxu0 0.0
        %481 = vmatpush1.msra.mxu0 0.0
        %482 = vmatprep.subr.mxu0 0.0
        %483 = vmatpush1.msra.mxu0 0.0
        %484 = vmatprep.subr.mxu0 0.0
        %485 = vmatpush1.msra.mxu0 0.0
        %486 = vmatprep.subr.mxu0 0.0
        %487 = vmatpush1.msra.mxu0 0.0
        %488 = vmatprep.subr.mxu0 0.0
        %489 = vmatpush1.msra.mxu0 %v456
        %490 = vmatprep.subr.mxu0 0.0
        %491 = vmatpush2.msra.mxu0 0.0
        %492 = vmatprep.subr.mxu0 0.0
        %493 = vmatpush2.msra.mxu0 0.0
        %494 = vmatprep.subr.mxu0 0.0
        %495 = vmatpush2.msra.mxu0 0.0
        %496 = vmatprep.subr.mxu0 0.0
        %497 = vmatpush2.msra.mxu0 0.0
        %498 = vmatprep.subr.mxu0 0.0
        %499 = vmatpush2.msra.mxu0 0.0
        %500 = vmatprep.subr.mxu0 0.0
        %501 = vmatpush2.msra.mxu0 0.0
        %502 = vmatprep.subr.mxu0 0.0
        %503 = vmatpush2.msra.mxu0 0.0
        %504 = vmatprep.subr.mxu0 0.0
        %505 = vmatpush2.msra.mxu0 0.0
        %506 = vmatprep.subr.mxu0 0.0
        %507 = vmatpush2.msra.mxu0 0.0
        %508 = vmatprep.subr.mxu0 0.0
        %509 = vmatpush2.msra.mxu0 0.0
        %510 = vmatprep.subr.mxu0 0.0
        %511 = vmatpush2.msra.mxu0 0.0
        %512 = vmatprep.subr.mxu0 0.0
        %513 = vmatpush2.msra.mxu0 0.0
        %514 = vmatprep.subr.mxu0 0.0
        %515 = vmatpush2.msra.mxu0 0.0
        %516 = vmatprep.subr.mxu0 0.0
        %517 = vmatpush2.msra.mxu0 0.0
        %518 = vmatprep.subr.mxu0 0.0
        %519 = vmatpush2.msra.mxu0 0.0
        %520 = vmatprep.subr.mxu0 0.0
        %521 = vmatpush2.msra.mxu0 0.0
        %522 = vmatprep.mubr.f32.mxu0 0.0
        %523 = vmatmul.mubr.f32.gmra.mxu0 %v452
        %v524 = vpop.f32.mrf.mxu0
        %v525 = vadd.f32 %v448, %v524
        %v526 = vpop.f32.mrf.mxu0
        %527 = vdwg.mxu0
        %v528 = vxor.u32 %v525, 2147483648
        %v529 = vmul.f32 %v528, 1.442695
        %v530 = vpow.pop %v529
        %v531 = vadd.f32 %v530, 1.0
        %v532 = vrcp.pop %v531
        %v533 = vmul.f32 1.0, %v532
        %v534 = vlaneseq
        %v535 = vshrl.u32 %v534, 7
        %v536 = vsub.s32 0, %v535
        %v537 = vrot.slane %v533, %v536
        %539 = vbcast.lane.b32.xlu0 %v537, 256
        %v540 = vpop.permute.xlu0 %539
        %s542 = sor.u32 256, 8
        %543 = vbcast.lane.b32.xlu0 %v537, %s542
        %v544 = vpop.permute.xlu0 %543
        %s546 = sor.u32 256, 16
        %547 = vbcast.lane.b32.xlu0 %v537, %s546
        %v548 = vpop.permute.xlu0 %547
        %s550 = sor.u32 256, 24
        %551 = vbcast.lane.b32.xlu0 %v537, %s550
        %v552 = vpop.permute.xlu0 %551
        %v553 = vlaneseq
        %v554 = vshrl.u32 %v553, 7
        %v555 = vsub.s32 1, %v554
        %v556 = vrot.slane %v533, %v555
        %558 = vbcast.lane.b32.xlu0 %v556, 256
        %v559 = vpop.permute.xlu0 %558
        %s561 = sor.u32 256, 8
        %562 = vbcast.lane.b32.xlu0 %v556, %s561
        %v563 = vpop.permute.xlu0 %562
        %s565 = sor.u32 256, 16
        %566 = vbcast.lane.b32.xlu0 %v556, %s565
        %v567 = vpop.permute.xlu0 %566
        %s569 = sor.u32 256, 24
        %570 = vbcast.lane.b32.xlu0 %v556, %s569
        %v571 = vpop.permute.xlu0 %570
        %v572 = vmul.f32 %v246, %v540
        %v573 = vmul.f32 %v247, %v540
        %v574 = vmul.f32 %v248, %v544
        %v575 = vmul.f32 %v249, %v544
        %v576 = vmul.f32 %v250, %v548
        %v577 = vmul.f32 %v251, %v548
        %v578 = vmul.f32 %v252, %v552
        %v579 = vmul.f32 %v253, %v552
        %v580 = vmul.f32 %v254, %v559
        %v581 = vmul.f32 %v255, %v559
        %v582 = vmul.f32 %v256, %v563
        %v583 = vmul.f32 %v257, %v563
        %v584 = vmul.f32 %v258, %v567
        %v585 = vmul.f32 %v259, %v567
        %v586 = vmul.f32 %v260, %v571
        %v587 = vmul.f32 %v261, %v571
        %588 = vst [vmem:[%s243] sm:$0xff] %v572
        %589 = vst [vmem:[%s243 + $0x8] sm:$0xff] %v573
        %590 = vst [vmem:[%s243 + $0x10] sm:$0xff] %v574
        %591 = vst [vmem:[%s243 + $0x18] sm:$0xff] %v575
        %592 = vst [vmem:[%s243 + $0x20] sm:$0xff] %v576
        %593 = vst [vmem:[%s243 + $0x28] sm:$0xff] %v577
        %594 = vst [vmem:[%s243 + $0x30] sm:$0xff] %v578
        %595 = vst [vmem:[%s243 + $0x38] sm:$0xff] %v579
        %596 = vst [vmem:[%s243 + $0x40] sm:$0xff] %v580
        %597 = vst [vmem:[%s243 + $0x48] sm:$0xff] %v581
        %598 = vst [vmem:[%s243 + $0x50] sm:$0xff] %v582
        %599 = vst [vmem:[%s243 + $0x58] sm:$0xff] %v583
        %600 = vst [vmem:[%s243 + $0x60] sm:$0xff] %v584
        %601 = vst [vmem:[%s243 + $0x68] sm:$0xff] %v585
        %602 = vst [vmem:[%s243 + $0x70] sm:$0xff] %v586
        %603 = vst [vmem:[%s243 + $0x78] sm:$0xff] %v587
        %s604 = sand.u32 %s140, 1
        %s605 = scalar_lea.sflag [#allocation4], %s604
        %s606 = sand.u32 %s140, 1
        %s607 = smul.addr %s606, 128
        %s608 = scalar_lea.vmem [#allocation5], %s607
        // Predicated region
        $region45: #{tpu_custom_call.1} parent=39 // pred_check
          %p609 = pneg %p150
        $region46: #{tpu_custom_call.1} parent=39 // pred_check_branch
          %611 = sbr.rel (%p609) target = $region48
        $region47: #{tpu_custom_call.1} parent=39 // pred_region
          %s612 = smul.u32 2, %s22
          %s614 = ssub.s32 2048, 2048
          %615 = vsyncadd %s605, %s614
          %s616 = smul.addr %s612, 8
          %s617 = smul.addr %s616, 128
          %s618 = scalar_lea.hbm %s5, %s617
          %s619 = sshll.u32 %s608, 4
          %s620 = int_to_ptr.vmem [resolvable:$true] %s619
          %625 = dma.vmem_to_hbm [thread:$0]  %s620, 2048, %s618, %s605, 256, 256, 16
        $region48: #{tpu_custom_call.1} parent=39 // pred_fallthru
          _
      $region40: #{tpu_custom_call.1} parent=5 // pred_fallthru
        _
      %p626 = scmp.le.s32.totalorder 2, %s17
      // Predicated region
      $region49: #{tpu_custom_call.1} parent=5 // pred_check
        %p627 = pneg %p626
      $region50: #{tpu_custom_call.1} parent=5 // pred_check_branch
        %629 = sbr.rel (%p627) target = $region52
      $region51: #{tpu_custom_call.1} parent=5 // pred_region
        %s630 = ssub.s32 %s17, 2
        // Predicated region
        $region53: #{tpu_custom_call.1} parent=51 // pred_check
          %p631 = pneg %p156
        $region54: #{tpu_custom_call.1} parent=51 // pred_check_branch
          %633 = sbr.rel (%p631) target = $region56
        $region55: #{tpu_custom_call.1} parent=51 // pred_region
          %s634 = sand.u32 %s141, 1
          %s635 = scalar_lea.sflag [#allocation4], %s634
          %s636 = sand.u32 %s141, 1
          %s637 = smul.addr %s636, 128
          %s638 = scalar_lea.vmem [#allocation5], %s637
          %639 = dma.done %s635, 2048
        $region56: #{tpu_custom_call.1} parent=51 // pred_fallthru
          _
      $region52: #{tpu_custom_call.1} parent=5 // pred_fallthru
        _
    $region6: #{tpu_custom_call.1} parent=1 // loop_footer
      %s21 = sadd.s32 1, %s17
    $region7: #{tpu_custom_call.1} parent=1 // loop_footer_branch
      %16 = sbr.rel target = $region3
    $region8: #{tpu_custom_call.1} parent=1 // loop_exit
      _
    %640 = vsyncpa [#allocation3], 1
    %s641 = scalar_lea.sflag [#allocation3], 1
    %642 = vsyncpa %s641, 1
    %643 = vsyncpa [#allocation4], 1
    %s644 = scalar_lea.sflag [#allocation4], 1
    %645 = vsyncpa %s644, 1

</llo_original>
